<compile_context>
chip_gen: v7x
topology: tpu7x:2x2x1
jax: 0.10.0
libtpu: 0.0.40
codegen_flags: <defaults>
</compile_context>

<pallas_src>
import functools

import numpy as np
import jax
import jax.numpy as jnp
from jax import lax
from jax.experimental import pallas as pl
from jax.experimental.pallas import tpu as pltpu

# Plain Python floats only (never close jnp arrays over a kernel).
_NEG_SENTINEL = -3.0e38   # finite "-inf"; every real center has >=1 neighbor (itself)
_FAR_COORD = 1.0e9        # padding coordinate, guaranteed outside any query ball


def _round_up(x, m):
    return ((x + m - 1) // m) * m


def _pick_tile(total, candidates):
    for c in candidates:
        if c <= total and total % c == 0:
            return c
    return total


# ----------------------------------------------------------------------------
# Kernel 1: farthest point sampling (start_with_first_point=True).
#   Point cloud arrives as [1, 3, 8, W] (N padded to 8*W and folded onto
#   sublanes+lanes) so the serial per-round distance update runs with dense
#   vregs instead of 1/8 sublane utilization.
# ----------------------------------------------------------------------------
def _fps_kernel(xyz_ref, new_xyz_ref, *, npoint):
    w = xyz_ref.shape[3]
    n8 = 8 * w
    # flat point index j = sublane * W + lane (matches the row-major reshape)
    idx = (lax.broadcasted_iota(jnp.int32, (8, w), 0) * w
           + lax.broadcasted_iota(jnp.int32, (8, w), 1))

    def body(i, carry):
        dist, far = carry                                  # [8, W] f32, [1, 1] i32
        onehot = (idx == far).astype(jnp.float32)          # exactly one 1
        d2 = jnp.zeros((8, w), jnp.float32)
        cols = []
        for d in range(3):
            xd = xyz_ref[0, d]                             # [8, W]
            cd = jnp.sum(jnp.sum(xd * onehot, axis=1, keepdims=True),
                         axis=0, keepdims=True)            # [1, 1] exact gather
            cols.append(cd)
            diff = xd - cd
            d2 = d2 + diff * diff
        # write the centroid row straight to the output (no carried centers).
        new_xyz_ref[0, pl.ds(i, 1), :] = jnp.concatenate(cols, axis=1)
        dist = jnp.minimum(dist, d2)
        m = jnp.max(jnp.max(dist, axis=1, keepdims=True), axis=0, keepdims=True)
        # argmax with first-index tie-break (pads carry indices >= N so real
        # points always win ties).
        cand = jnp.where(dist >= m, idx, n8)
        far = jnp.min(jnp.min(cand, axis=1, keepdims=True), axis=0, keepdims=True)
        return dist, far

    init = (jnp.full((8, w), 1e10, jnp.float32),           # running min distance
            jnp.zeros((1, 1), jnp.int32))                  # start with point 0
    lax.fori_loop(0, npoint, body, init)


# ----------------------------------------------------------------------------
# Kernel 2: ball query + masked max pool.
#   Grid (B, S_tiles, N_chunks); N is the innermost "arbitrary" reduction axis
#   carried through VMEM scratch (running max + in-radius prefix count).
# ----------------------------------------------------------------------------
def _masked_maxpool_kernel(new_xyz_ref, xyz_ref, feat_ref, tri_ref, out_ref,
                           acc_ref, cnt_ref, *, radius2, k, c_sub):
    n_idx = pl.program_id(2)

    @pl.when(n_idx == 0)
    def _init():
        acc_ref[...] = jnp.full(acc_ref.shape, _NEG_SENTINEL, acc_ref.dtype)
        cnt_ref[...] = jnp.zeros(cnt_ref.shape, cnt_ref.dtype)

    # The centers block is invariant across the innermost N axis, so Pallas
    # keeps it resident in VMEM (no per-chunk HBM re-fetch).
    cx = new_xyz_ref[0]                                    # [S_t, 3]
    x = xyz_ref[0]                                         # [3, N_c] lane-major
    s_t, n_c = cx.shape[0], x.shape[1]

    # Squared distances [S_t, N_c]: three broadcasted (c_d - x_d)^2 adds
    # (exact; no ||a||^2 + ||b||^2 - 2ab cancellation).
    sqd = jnp.zeros((s_t, n_c), jnp.float32)
    for d in range(3):
        diff = cx[:, d:d + 1] - x[d:d + 1, :]
        sqd = sqd + diff * diff

    within = sqd <= radius2                                # [S_t, N_c] bool

    # Inclusive prefix count along N as ONE MXU matmul against the constant 0/1
    # upper-triangular matrix (bf16 inputs, f32 accumulation => exact integer
    # counts). Replaces the concat-based Hillis-Steele scan that burned
    # ~log2(N_c) full-slab copies of load/store slots per chunk.
    csum = jnp.dot(within.astype(jnp.bfloat16), tri_ref[...],
                   preferred_element_type=jnp.float32)     # [S_t, N_c]

    rank = cnt_ref[...] + csum                             # carried prefix + local
    selected = within & (rank <= float(k))
    cnt_ref[...] = cnt_ref[...] + jnp.sum(within.astype(jnp.float32),
                                          axis=1, keepdims=True)

    # Running masked max, tiled over channels: only a [c_sub, S_t, N_c] slab
    # exists at a time (the full [C, S_t, N_c] temporary is never built).
    n_ch = feat_ref.shape[1]
    for c0 in range(0, n_ch, c_sub):
        cs = min(c_sub, n_ch - c0)
        f = feat_ref[0, c0:c0 + cs, :]                     # [cs, N_c]
        masked = jnp.where(selected[None, :, :], f[:, None, :], _NEG_SENTINEL)
        acc_ref[c0:c0 + cs, :] = jnp.maximum(acc_ref[c0:c0 + cs, :],
                                             jnp.max(masked, axis=-1))

    @pl.when(n_idx == pl.num_programs(2) - 1)
    def _finalize():
        out_ref[0] = acc_ref[...].astype(out_ref.dtype)


def _vmem_estimate(C, s_tile, n_chunk, c_sub):
    f32 = 4
    blocks = (s_tile * 128          # centers block (lane dim 3 padded to 128)
              + 8 * n_chunk         # xyz block (sublane dim 3 padded to 8)
              + C * n_chunk         # feature block
              + C * s_tile) * f32   # output block
    tri = n_chunk * n_chunk * 2
    scratch = (C * s_tile + s_tile * 128) * f32
    temps = (c_sub + 6) * s_tile * n_chunk * f32
    return 2 * (blocks + tri) + scratch + temps


# ----------------------------------------------------------------------------
# Wrapper (the MaskedMaxPool forward)
# ----------------------------------------------------------------------------
def masked_max_pool(xyz, features, *, npoint, radius, k):
    """
    xyz:      [B, N, 3] float32
    features: [B, C, N] float32
    returns (sub_xyz [B, npoint, 3], sub_features [B, C, npoint])
    """
    B, N, _ = xyz.shape
    C = features.shape[1]
    S = int(npoint)

    xyz = xyz.astype(jnp.float32)
    xyz_t = jnp.transpose(xyz, (0, 2, 1))                  # [B, 3, N] lane-major

    # ---- farthest point sampling ----
    N8 = _round_up(N, 8)
    xyz_fps = xyz_t
    if N8 != N:
        # Pad with copies of point 0: their distance collapses to 0 after round
        # 0 and the min-index tie-break means a padded copy is never selected.
        pad = jnp.broadcast_to(xyz_t[:, :, :1], (B, 3, N8 - N))
        xyz_fps = jnp.concatenate([xyz_t, pad], axis=2)
    W = N8 // 8
    xyz_fps = xyz_fps.reshape(B, 3, 8, W)                  # sublane+lane dense

    # TODO(synk): on v7x with B == 1 per chip the (B,)-parallel FPS grid leaves
    # one TensorCore idle; a core_map split of the O(N) distance update plus a
    # tiny argmax combine would recover it.
    new_xyz = pl.pallas_call(
        functools.partial(_fps_kernel, npoint=S),
        out_shape=jax.ShapeDtypeStruct((B, S, 3), jnp.float32),
        grid=(B,),
        in_specs=[pl.BlockSpec((1, 3, 8, W), lambda b: (b, 0, 0, 0))],
        out_specs=pl.BlockSpec((1, S, 3), lambda b: (b, 0, 0)),
        compiler_params=pltpu.CompilerParams(dimension_semantics=("parallel",)),
    )(xyz_fps)                                             # [B, S, 3]

    # ---- ball query + masked max pool ----
    S_pad = _round_up(S, 128)                              # lane-dense output stores
    N_pad = _round_up(N, 128)

    centers = new_xyz
    if S_pad != S:                                         # pad centers far away
        centers = jnp.concatenate(
            [centers, jnp.full((B, S_pad - S, 3), _FAR_COORD, jnp.float32)], axis=1)
    xyz_pool, feats = xyz_t, features
    if N_pad != N:                                         # pad points out of every ball
        xyz_pool = jnp.concatenate(
            [xyz_pool, jnp.full((B, 3, N_pad - N), 2.0 * _FAR_COORD, jnp.float32)],
            axis=2)
        feats = jnp.concatenate(
            [feats, jnp.zeros((B, C, N_pad - N), feats.dtype)], axis=2)

    # Tile selection: grow s_tile first (each S-tile re-streams the [C, N]
    # features from HBM once, so bigger s_tile = fewer re-reads — matters most
    # on v5e), keep n_chunk a 128/256 multiple for full MXU tiles, and bound
    # the per-step [c_sub, s_tile, n_chunk] select/max slab.
    s_tile = _pick_tile(S_pad, (512, 256, 128))
    n_chunk = _pick_tile(N_pad, (512, 256, 128))
    c_sub = 32 if C >= 32 else (16 if C >= 16 else (8 if C >= 8 else C))

    try:
        phys_vmem = int(pltpu.get_tpu_info().vmem_capacity_bytes)
    except Exception:
        phys_vmem = 64 << 20                               # smallest per-core VMEM (v7x)
    vmem_cap = int(phys_vmem * 0.65)                       # generation-aware clamp

    while True:
        slab = c_sub * s_tile * n_chunk * 4
        est = _vmem_estimate(C, s_tile, n_chunk, c_sub)
        if slab <= (4 << 20) and est <= vmem_cap:
            break
        if c_sub > 8:
            c_sub //= 2
        elif n_chunk > 128:
            n_chunk //= 2
        elif s_tile > 128:
            s_tile //= 2
        else:
            break

    # Constant 0/1 upper-triangular matrix for the prefix-count matmul (bf16:
    # 0/1 exact, full MXU tiles; counts accumulate exactly in f32).
    tri = jnp.asarray(
        np.arange(n_chunk)[:, None] <= np.arange(n_chunk)[None, :],
        dtype=jnp.bfloat16)

    grid = (B, S_pad // s_tile, N_pad // n_chunk)
    kernel = functools.partial(_masked_maxpool_kernel,
                               radius2=float(radius) ** 2, k=int(k), c_sub=c_sub)

    pooled = pl.pallas_call(
        kernel,
        out_shape=jax.ShapeDtypeStruct((B, C, S_pad), features.dtype),
        grid=grid,
        in_specs=[
            pl.BlockSpec((1, s_tile, 3), lambda b, s, n: (b, s, 0)),    # centers
            pl.BlockSpec((1, 3, n_chunk), lambda b, s, n: (b, 0, n)),   # points
            pl.BlockSpec((1, C, n_chunk), lambda b, s, n: (b, 0, n)),   # features
            pl.BlockSpec((n_chunk, n_chunk), lambda b, s, n: (0, 0)),   # tri const
        ],
        out_specs=pl.BlockSpec((1, C, s_tile), lambda b, s, n: (b, 0, s)),
        scratch_shapes=[
            pltpu.VMEM((C, s_tile), jnp.float32),   # running neighbor max
            pltpu.VMEM((s_tile, 1), jnp.float32),   # carried in-radius prefix count
        ],
        compiler_params=pltpu.CompilerParams(
            dimension_semantics=("parallel", "parallel", "arbitrary"),
            vmem_limit_bytes=vmem_cap),
    )(centers, xyz_pool, feats, tri)

    sub_features = pooled[:, :, :S] if S_pad != S else pooled
    return new_xyz, sub_features


# ----------------------------------------------------------------------------
# Pure-JAX reference for the ball-query + masked max (self-check only).
# ----------------------------------------------------------------------------
def _reference_pool(xyz, features, new_xyz, radius, k):
    sqd = jnp.sum((new_xyz[:, :, None, :] - xyz[:, None, :, :]) ** 2, axis=-1)
    within = sqd <= radius ** 2                            # [B, S, N]
    rank = jnp.cumsum(within.astype(jnp.int32), axis=-1)
    sel = within & (rank <= k)
    masked = jnp.where(sel[:, None, :, :], features[:, :, None, :], _NEG_SENTINEL)
    return jnp.max(masked, axis=-1)                        # [B, C, S]


if __name__ == "__main__":
    key = jax.random.PRNGKey(0)
    B, N, C = 2, 32, 8
    npoint, radius, k = 8, 0.4, 4

    k1, k2 = jax.random.split(key)
    xyz = jax.random.uniform(k1, (B, N, 3), dtype=jnp.float32)
    features = jax.random.normal(k2, (B, C, N), dtype=jnp.float32)

    sub_xyz, sub_features = masked_max_pool(
        xyz, features, npoint=npoint, radius=radius, k=k)
    jax.block_until_ready((sub_xyz, sub_features))

    assert sub_xyz.shape == (B, npoint, 3), sub_xyz.shape
    assert sub_features.shape == (B, C, npoint), sub_features.shape
    assert bool(jnp.all(jnp.isfinite(sub_features)))
    # FPS starts at point 0, so the first sampled center is exactly point 0.
    assert bool(jnp.allclose(sub_xyz[:, 0, :], xyz[:, 0, :]))
    # Cross-check ball-query + masked max pool against a pure-JAX reference.
    ref = _reference_pool(xyz, features, sub_xyz, radius, k)
    assert bool(jnp.allclose(sub_features, ref, rtol=1e-5, atol=1e-5))

    print("KERNEL_OK")
</pallas_src>

<mosaic_0001>
module attributes {stable_mosaic.version = 11 : i64} {
  func.func @_fps_kernel(%arg0: i32, %arg1: memref<1x3x8x4xf32, #tpu.memory_space<vmem>>, %arg2: memref<1x8x3xf32, #tpu.memory_space<vmem>>) attributes {dimension_semantics = [#tpu.dimension_semantics<parallel>], iteration_bounds = array<i64: 2>, scalar_prefetch = 0 : i64, scratch_operands = 0 : i64, tpu.core_type = #tpu.core_type<tc>, window_params = [{transform_indices = @transform_0, window_bounds = array<i64: 1, 3, 8, 4>}, {transform_indices = @transform_1, window_bounds = array<i64: 1, 8, 3>}]} {
    %0 = tpu.iota {dimensions = array<i32: 0>} : vector<8x4xi32>
    %c4_i32 = arith.constant 4 : i32
    %1 = vector.broadcast %c4_i32 : i32 to vector<8x4xi32>
    %2 = arith.muli %0, %1 : vector<8x4xi32>
    %3 = tpu.iota {dimensions = array<i32: 1>} : vector<8x4xi32>
    %4 = arith.addi %2, %3 : vector<8x4xi32>
    %cst = arith.constant 1.000000e+10 : f32
    %5 = vector.broadcast %cst : f32 to vector<8x4xf32>
    %c0_i32 = arith.constant 0 : i32
    %6 = vector.broadcast %c0_i32 : i32 to vector<1x1xi32>
    %c0_i32_0 = arith.constant 0 : i32
    %c8_i32 = arith.constant 8 : i32
    %7 = arith.addi %c0_i32_0, %c8_i32 : i32
    %c1_i32 = arith.constant 1 : i32
    %8:2 = scf.for %arg3 = %c0_i32_0 to %7 step %c1_i32 iter_args(%arg4 = %5, %arg5 = %6) -> (vector<8x4xf32>, vector<1x1xi32>)  : i32 {
      %9 = vector.broadcast %arg5 : vector<1x1xi32> to vector<8x4xi32>
      %10 = arith.cmpi eq, %4, %9 : vector<8x4xi32>
      %11 = arith.extui %10 : vector<8x4xi1> to vector<8x4xi32>
      %12 = arith.sitofp %11 : vector<8x4xi32> to vector<8x4xf32>
      %cst_2 = arith.constant 0.000000e+00 : f32
      %13 = vector.broadcast %cst_2 : f32 to vector<8x4xf32>
      %c0 = arith.constant 0 : index
      %c0_3 = arith.constant 0 : index
      %c0_4 = arith.constant 0 : index
      %c0_5 = arith.constant 0 : index
      %14 = vector.load %arg1[%c0, %c0_3, %c0_4, %c0_5] : memref<1x3x8x4xf32, #tpu.memory_space<vmem>>, vector<1x1x8x4xf32>
      %15 = vector.shape_cast %14 : vector<1x1x8x4xf32> to vector<8x4xf32>
      %16 = arith.mulf %15, %12 : vector<8x4xf32>
      %cst_6 = arith.constant dense<0.000000e+00> : vector<8xf32>
      %17 = vector.multi_reduction <add>, %16, %cst_6 [1] : vector<8x4xf32> to vector<8xf32>
      %18 = vector.shape_cast %17 : vector<8xf32> to vector<8x1xf32>
      %cst_7 = arith.constant dense<0.000000e+00> : vector<1xf32>
      %19 = vector.multi_reduction <add>, %18, %cst_7 [0] : vector<8x1xf32> to vector<1xf32>
      %20 = vector.shape_cast %19 : vector<1xf32> to vector<1x1xf32>
      %21 = vector.broadcast %20 : vector<1x1xf32> to vector<8x4xf32>
      %22 = arith.subf %15, %21 : vector<8x4xf32>
      %23 = arith.mulf %22, %22 : vector<8x4xf32>
      %24 = arith.addf %13, %23 : vector<8x4xf32>
      %c0_8 = arith.constant 0 : index
      %c1 = arith.constant 1 : index
      %c0_9 = arith.constant 0 : index
      %c0_10 = arith.constant 0 : index
      %25 = vector.load %arg1[%c0_8, %c1, %c0_9, %c0_10] : memref<1x3x8x4xf32, #tpu.memory_space<vmem>>, vector<1x1x8x4xf32>
      %26 = vector.shape_cast %25 : vector<1x1x8x4xf32> to vector<8x4xf32>
      %27 = arith.mulf %26, %12 : vector<8x4xf32>
      %cst_11 = arith.constant dense<0.000000e+00> : vector<8xf32>
      %28 = vector.multi_reduction <add>, %27, %cst_11 [1] : vector<8x4xf32> to vector<8xf32>
      %29 = vector.shape_cast %28 : vector<8xf32> to vector<8x1xf32>
      %cst_12 = arith.constant dense<0.000000e+00> : vector<1xf32>
      %30 = vector.multi_reduction <add>, %29, %cst_12 [0] : vector<8x1xf32> to vector<1xf32>
      %31 = vector.shape_cast %30 : vector<1xf32> to vector<1x1xf32>
      %32 = vector.broadcast %31 : vector<1x1xf32> to vector<8x4xf32>
      %33 = arith.subf %26, %32 : vector<8x4xf32>
      %34 = arith.mulf %33, %33 : vector<8x4xf32>
      %35 = arith.addf %24, %34 : vector<8x4xf32>
      %c0_13 = arith.constant 0 : index
      %c2 = arith.constant 2 : index
      %c0_14 = arith.constant 0 : index
      %c0_15 = arith.constant 0 : index
      %36 = vector.load %arg1[%c0_13, %c2, %c0_14, %c0_15] : memref<1x3x8x4xf32, #tpu.memory_space<vmem>>, vector<1x1x8x4xf32>
      %37 = vector.shape_cast %36 : vector<1x1x8x4xf32> to vector<8x4xf32>
      %38 = arith.mulf %37, %12 : vector<8x4xf32>
      %cst_16 = arith.constant dense<0.000000e+00> : vector<8xf32>
      %39 = vector.multi_reduction <add>, %38, %cst_16 [1] : vector<8x4xf32> to vector<8xf32>
      %40 = vector.shape_cast %39 : vector<8xf32> to vector<8x1xf32>
      %cst_17 = arith.constant dense<0.000000e+00> : vector<1xf32>
      %41 = vector.multi_reduction <add>, %40, %cst_17 [0] : vector<8x1xf32> to vector<1xf32>
      %42 = vector.shape_cast %41 : vector<1xf32> to vector<1x1xf32>
      %43 = vector.broadcast %42 : vector<1x1xf32> to vector<8x4xf32>
      %44 = arith.subf %37, %43 : vector<8x4xf32>
      %45 = arith.mulf %44, %44 : vector<8x4xf32>
      %46 = arith.addf %35, %45 : vector<8x4xf32>
      %47 = tpu.concatenate %20, %31, %42 in 1 : vector<1x1xf32>, vector<1x1xf32>, vector<1x1xf32> -> vector<1x3xf32>
      %c0_18 = arith.constant 0 : index
      %48 = arith.index_cast %arg3 : i32 to index
      %c0_19 = arith.constant 0 : index
      %49 = vector.load %arg2[%c0_18, %48, %c0_19] : memref<1x8x3xf32, #tpu.memory_space<vmem>>, vector<1x1x3xf32>
      %50 = vector.shape_cast %49 : vector<1x1x3xf32> to vector<1x3xf32>
      %51 = vector.shape_cast %47 : vector<1x3xf32> to vector<1x1x3xf32>
      tpu.vector_store %arg2[%c0_18, %48, %c0_19], %51 {strides = array<i32>} : memref<1x8x3xf32, #tpu.memory_space<vmem>>, vector<1x1x3xf32>,
      %52 = arith.minimumf %arg4, %46 : vector<8x4xf32>
      %cst_20 = arith.constant dense<0xFF800000> : vector<8xf32>
      %53 = vector.multi_reduction <maximumf>, %52, %cst_20 [1] : vector<8x4xf32> to vector<8xf32>
      %54 = vector.shape_cast %53 : vector<8xf32> to vector<8x1xf32>
      %cst_21 = arith.constant dense<0xFF800000> : vector<1xf32>
      %55 = vector.multi_reduction <maximumf>, %54, %cst_21 [0] : vector<8x1xf32> to vector<1xf32>
      %56 = vector.shape_cast %55 : vector<1xf32> to vector<1x1xf32>
      %57 = vector.broadcast %56 : vector<1x1xf32> to vector<8x4xf32>
      %58 = arith.cmpf oge, %52, %57 : vector<8x4xf32>
      %c32_i32 = arith.constant 32 : i32
      %59 = vector.broadcast %c32_i32 : i32 to vector<8x4xi32>
      %60 = arith.select %58, %4, %59 : vector<8x4xi1>, vector<8x4xi32>
      %cst_22 = arith.constant dense<2147483647> : vector<8xi32>
      %61 = vector.multi_reduction <minsi>, %60, %cst_22 [1] : vector<8x4xi32> to vector<8xi32>
      %62 = vector.shape_cast %61 : vector<8xi32> to vector<8x1xi32>
      %cst_23 = arith.constant dense<2147483647> : vector<1xi32>
      %63 = vector.multi_reduction <minsi>, %62, %cst_23 [0] : vector<8x1xi32> to vector<1xi32>
      %64 = vector.shape_cast %63 : vector<1xi32> to vector<1x1xi32>
      scf.yield %52, %64 : vector<8x4xf32>, vector<1x1xi32>
    }
    %c8_i32_1 = arith.constant 8 : i32
    return
  }
  func.func @transform_0(%arg0: i32) -> (i32, i32, i32, i32) {
    %c0_i32 = arith.constant 0 : i32
    %c0_i32_0 = arith.constant 0 : i32
    %c0_i32_1 = arith.constant 0 : i32
    %c0_i32_2 = arith.constant 0 : i32
    return %arg0, %c0_i32, %c0_i32_0, %c0_i32_1 : i32, i32, i32, i32
  }
  func.func @transform_1(%arg0: i32) -> (i32, i32, i32) {
    %c0_i32 = arith.constant 0 : i32
    %c0_i32_0 = arith.constant 0 : i32
    %c0_i32_1 = arith.constant 0 : i32
    return %arg0, %c0_i32, %c0_i32_0 : i32, i32, i32
  }
}

</mosaic_0001>

<llo_original>
// kernel: tpu_custom_call.1
$region0: #{tpu_custom_call.1}
  #allocation0 [shape = 'u32[]', space=smem, size = 0x4, offset = 0x4, fixed_abs, tag = 'smem constant byte address 0x4 - core index']
  #allocation1 [shape = 'u32[144,128]{1,0:T(1,128)}', space=vmem, size = 0x12000, scoped, tag = 'internal scratch']
  %s0 = inlined_call_operand.vmem [shape: f32[2,3,8,4], index: 0, kind: input, shape index: {}]
  %s1 = inlined_call_operand.vmem [shape: f32[2,8,3], index: 1, kind: output, shape index: {}]
  %s2 = sld [smem:[#allocation0]]
  $region44: #{tpu_custom_call.1} parent=0
    _
  %s4 = ssub.s32 1, %s2
  %s5 = scalar_select 0, %s4, %s2
  loop: start=0, step=1, limit=4
  $region2: #{tpu_custom_call.1} parent=0 // loop_pre_header
    _
  $region3: #{tpu_custom_call.1} parent=0 // loop_header
    %s7 = sphi 0, %s11
    %p8 = scmp.ge.s32.totalorder %s7, 4
    %s17 = sphi 0, %s19
    %s20 = sphi 0, %s17
    %s21 = sphi 0, %s20
    %s37 = sphi 0, %s21
    %s43 = sphi 0, %s45
    %s46 = sphi 0, %s43
    %s47 = sphi 0, %s46
    %s63 = sphi 0, %s47
  $region4: #{tpu_custom_call.1} parent=0 // loop_header_branch
    %10 = sbr.rel (%p8) target = $region8
  $region5: #{tpu_custom_call.1} parent=0 // loop_body
    %s12 = ssub.s32 %s7, 1
    %s13 = ssub.s32 %s7, 2
    %s14 = sadd.s32 %s7, 1
    %s15 = ssub.s32 %s7, %s14
    %p16 = scmp.eq.s32.totalorder %s15, 0
    %s18 = sadd.s32 %s17, 1
    %s19 = scalar_select %p16, %s17, %s18
    %p22 = pneg %p16
    %p23 = scmp.eq.s32.totalorder %s7, 1
    %p24 = por %p22, %p23
    %p25 = scmp.ne.s32.totalorder %s17, %s20
    %p26 = scmp.eq.s32.totalorder %s7, 0
    %p27 = por %p25, %p26
    %p28 = scmp.ne.s32.totalorder %s17, %s20
    %p29 = scmp.eq.s32.totalorder %s12, 1
    %p30 = por %p28, %p29
    %p31 = scmp.ne.s32.totalorder %s20, %s21
    %p32 = scmp.eq.s32.totalorder %s12, 0
    %p33 = por %p31, %p32
    %p34 = scmp.ne.s32.totalorder %s20, %s21
    %p35 = scmp.eq.s32.totalorder %s13, 1
    %p36 = por %p34, %p35
    %p38 = scmp.ne.s32.totalorder %s21, %s37
    %p39 = scmp.eq.s32.totalorder %s13, 0
    %p40 = por %p38, %p39
    %s41 = ssub.s32 %s7, %s14
    %p42 = scmp.eq.s32.totalorder %s41, 0
    %s44 = sadd.s32 %s43, 1
    %s45 = scalar_select %p42, %s43, %s44
    %p48 = pneg %p42
    %p49 = scmp.eq.s32.totalorder %s7, 1
    %p50 = por %p48, %p49
    %p51 = scmp.ne.s32.totalorder %s43, %s46
    %p52 = scmp.eq.s32.totalorder %s7, 0
    %p53 = por %p51, %p52
    %p54 = scmp.ne.s32.totalorder %s43, %s46
    %p55 = scmp.eq.s32.totalorder %s12, 1
    %p56 = por %p54, %p55
    %p57 = scmp.ne.s32.totalorder %s46, %s47
    %p58 = scmp.eq.s32.totalorder %s12, 0
    %p59 = por %p57, %p58
    %p60 = scmp.ne.s32.totalorder %s46, %s47
    %p61 = scmp.eq.s32.totalorder %s13, 1
    %p62 = por %p60, %p61
    %p64 = scmp.ne.s32.totalorder %s47, %s63
    %p65 = scmp.eq.s32.totalorder %s13, 0
    %p66 = por %p64, %p65
    %p67 = scmp.le.s32.totalorder 1, %s7
    %p68 = scmp.lt.s32.totalorder %s7, 3
    %p69 = pnand %p67, %p68
    %p70 = pneg %p69
    // Predicated region
    $region9: #{tpu_custom_call.1} parent=5 // pred_check
      _
    $region10: #{tpu_custom_call.1} parent=5 // pred_check_branch
      %72 = sbr.rel (%p69) target = $region12
    $region11: #{tpu_custom_call.1} parent=5 // pred_region
      %s73 = ssub.s32 %s7, 1
    $region12: #{tpu_custom_call.1} parent=5 // pred_fallthru
      _
    %p74 = scmp.lt.s32.totalorder %s7, 2
    // Predicated region
    $region13: #{tpu_custom_call.1} parent=5 // pred_check
      %p75 = pneg %p74
    $region14: #{tpu_custom_call.1} parent=5 // pred_check_branch
      %77 = sbr.rel (%p75) target = $region16
    $region15: #{tpu_custom_call.1} parent=5 // pred_region
      // Predicated region
      $region17: #{tpu_custom_call.1} parent=15 // pred_check
        %p78 = pneg %p27
      $region18: #{tpu_custom_call.1} parent=15 // pred_check_branch
        %80 = sbr.rel (%p78) target = $region20
      $region19: #{tpu_custom_call.1} parent=15 // pred_region
        %p81 = scmp.lt.s32.totalorder %s7, 1
        %s82 = scalar_select %p81, %s7, 1
        %s83 = smul.addr %s82, 3
        %s84 = smul.addr %s83, 8
        %s85 = scalar_lea.vmem %s0, %s84
      $region20: #{tpu_custom_call.1} parent=15 // pred_fallthru
        _
    $region16: #{tpu_custom_call.1} parent=5 // pred_fallthru
      _
    %p86 = scmp.le.s32.totalorder 1, %s7
    %p87 = scmp.lt.s32.totalorder %s7, 3
    %p88 = pnand %p86, %p87
    %p89 = pneg %p88
    // Predicated region
    $region21: #{tpu_custom_call.1} parent=5 // pred_check
      _
    $region22: #{tpu_custom_call.1} parent=5 // pred_check_branch
      %91 = sbr.rel (%p88) target = $region24
    $region23: #{tpu_custom_call.1} parent=5 // pred_region
      %s92 = ssub.s32 %s7, 1
      %p93 = scmp.lt.s32.totalorder %s12, 1
      %s94 = scalar_select %p93, %s12, 1
      %s95 = smul.addr %s94, 3
      %s96 = smul.addr %s95, 8
      %s97 = scalar_lea.vmem %s0, %s96
      %p98 = pneg %p33
      %p99 = pneg %p30
      %p100 = pneg %p59
      %p101 = pneg %p56
      %p102 = scmp.lt.s32.totalorder %s12, 1
      %s103 = scalar_select %p102, %s12, 1
      %s104 = smul.addr %s103, 8
      %s105 = scalar_lea.vmem %s1, %s104
      %p106 = scmp.lt.s32.totalorder %s12, 1
      %s107 = scalar_select %p106, %s12, 1
      %s108 = smul.addr %s107, 3
      %s109 = smul.addr %s108, 8
      %s110 = scalar_lea.vmem %s0, %s109
      %p111 = scmp.lt.s32.totalorder %s12, 1
      %s112 = scalar_select %p111, %s12, 1
      %s113 = smul.addr %s112, 8
      %s114 = scalar_lea.vmem %s1, %s113
      %v115 = vlaneseq
      %v116 = vshrl.u32 %v115, 7
      %v117 = vmul.u32 %v116, 4
      %v118 = vlaneseq
      %v119 = vand.u32 %v118, 127
      %v120 = vadd.s32 %v117, %v119
      loop: start=0, step=1, limit=8
      $region25: #{tpu_custom_call.1} parent=23 // loop_pre_header
        _
      $region26: #{tpu_custom_call.1} parent=23 // loop_header
        %s122 = sphi 0, %s126
        %p123 = scmp.ge.s32.totalorder %s122, 8
        %v127 = vphi 1e+10, %v184
        %v128 = vphi 0, %v219
      $region27: #{tpu_custom_call.1} parent=23 // loop_header_branch
        %125 = sbr.rel (%p123) target = $region31
      $region28: #{tpu_custom_call.1} parent=23 // loop_body
        %vm129 = vcmp.eq.s32.totalorder %v120, %v128
        %v130 = vsel %vm129, 1, 0
        %v131 = vcvt.s32.f32 %v130
        %v132 = vld [vmem:[%s110] sm:$0xff]
        %v133 = vmul.f32 %v132, %v131
        %vm134 = vcmask 31744
        %v135 = vsel %vm134, %v133, 0.0
        %136 = vadd.xlane.f32.xlu0 %v135
        %v137 = vpop.xlane.xlu0 %136
        %v138 = vrot.slane %v137, 4
        %v139 = vadd.f32 %v137, %v138
        %v140 = vrot.slane %v139, 2
        %v141 = vadd.f32 %v139, %v140
        %v142 = vrot.slane %v141, 1
        %v143 = vadd.f32 %v141, %v142
        %v144 = vsub.f32 %v132, %v143
        %v145 = vmul.f32 %v144, %v144
        %v146 = vadd.f32 %v145, 0.0
        %s147 = scalar_lea.vmem %s110, 8
        %v148 = vld [vmem:[%s147] sm:$0xff]
        %v149 = vmul.f32 %v148, %v131
        %v150 = vsel %vm134, %v149, 0.0
        %151 = vadd.xlane.f32.xlu0 %v150
        %v152 = vpop.xlane.xlu0 %151
        %v153 = vrot.slane %v152, 4
        %v154 = vadd.f32 %v152, %v153
        %v155 = vrot.slane %v154, 2
        %v156 = vadd.f32 %v154, %v155
        %v157 = vrot.slane %v156, 1
        %v158 = vadd.f32 %v156, %v157
        %v159 = vsub.f32 %v148, %v158
        %v160 = vmul.f32 %v159, %v159
        %v161 = vadd.f32 %v146, %v160
        %s162 = scalar_lea.vmem %s110, 16
        %v163 = vld [vmem:[%s162] sm:$0xff]
        %v164 = vmul.f32 %v163, %v131
        %v165 = vsel %vm134, %v164, 0.0
        %166 = vadd.xlane.f32.xlu0 %v165
        %v167 = vpop.xlane.xlu0 %166
        %v168 = vrot.slane %v167, 4
        %v169 = vadd.f32 %v167, %v168
        %v170 = vrot.slane %v169, 2
        %v171 = vadd.f32 %v169, %v170
        %v172 = vrot.slane %v171, 1
        %v173 = vadd.f32 %v171, %v172
        %v174 = vsub.f32 %v163, %v173
        %v175 = vmul.f32 %v174, %v174
        %v176 = vadd.f32 %v161, %v175
        %vm177 = vcmask 7168
        %v178 = vsel %vm177, %v143, %v158
        %vm179 = vcmask 15360
        %v180 = vsel %vm179, %v178, %v173
        %s181 = scalar_lea.vmem %s114, %s122
        %vm182 = vcmask 16384
        %183 = vst.msk [vmem:[%s181] sm:$0x1] %vm182, %v180
        %v184 = vmin.f32 %v127, %v176
        %v185 = vsel %vm134, %v184, -inf
        %186 = vmax.xlane.f32.xlu0 %v185
        %v187 = vpop.xlane.xlu0 %186
        %v188 = vrot.slane %v187, 4
        %v189 = vmax.f32 %v187, %v188
        %v190 = vrot.slane %v189, 2
        %v191 = vmax.f32 %v189, %v190
        %v192 = vrot.slane %v191, 1
        %v193 = vmax.f32 %v191, %v192
        %vm194 = vcmp.ge.f32.partialorder %v184, %v193
        %v195 = vsel %vm194, %v120, 32
        %v196 = vsel %vm134, %v195, 2147483647
        %v197 = vand.u32 %v196, 65535
        %v198 = vshra.s32 %v196, 16
        %v199 = vcvt.s32.f32 %v197
        %v200 = vcvt.s32.f32 %v198
        %201 = vmin.xlane.f32.xlu0 %v200
        %v202 = vpop.xlane.xlu0 %201
        %vm203 = vcmp.eq.f32.partialorder %v200, %v202
        %v204 = vsel %vm203, %v199, inf
        %205 = vmin.xlane.f32.xlu0 %v204
        %v206 = vpop.xlane.xlu0 %205
        %v207 = vcvt.f32.s32 %v206
        %v208 = vcvt.f32.s32 %v202
        %v209 = vshll.u32 %v208, 16
        %v210 = vadd.s32 %v209, %v207
        %v211 = vrot.slane %v210, 4
        %vm212 = vcmp.lt.s32.totalorder %v210, %v211
        %v213 = vsel %vm212, %v210, %v211
        %v214 = vrot.slane %v213, 2
        %vm215 = vcmp.lt.s32.totalorder %v213, %v214
        %v216 = vsel %vm215, %v213, %v214
        %v217 = vrot.slane %v216, 1
        %vm218 = vcmp.lt.s32.totalorder %v216, %v217
        %v219 = vsel %vm218, %v216, %v217
      $region29: #{tpu_custom_call.1} parent=23 // loop_footer
        %s126 = sadd.s32 1, %s122
      $region30: #{tpu_custom_call.1} parent=23 // loop_footer_branch
        %121 = sbr.rel target = $region26
      $region31: #{tpu_custom_call.1} parent=23 // loop_exit
        _
      %p220 = scmp.lt.s32.totalorder %s12, 1
      %s221 = scalar_select %p220, %s12, 1
      %s222 = smul.addr %s221, 8
      %s223 = scalar_lea.vmem %s1, %s222
      // Predicated region
      $region32: #{tpu_custom_call.1} parent=23 // pred_check
        %p224 = pneg %p56
      $region33: #{tpu_custom_call.1} parent=23 // pred_check_branch
        %226 = sbr.rel (%p224) target = $region35
      $region34: #{tpu_custom_call.1} parent=23 // pred_region
        _
      $region35: #{tpu_custom_call.1} parent=23 // pred_fallthru
        _
    $region24: #{tpu_custom_call.1} parent=5 // pred_fallthru
      _
    %p227 = scmp.le.s32.totalorder 2, %s7
    // Predicated region
    $region36: #{tpu_custom_call.1} parent=5 // pred_check
      %p228 = pneg %p227
    $region37: #{tpu_custom_call.1} parent=5 // pred_check_branch
      %230 = sbr.rel (%p228) target = $region39
    $region38: #{tpu_custom_call.1} parent=5 // pred_region
      %s231 = ssub.s32 %s7, 2
      // Predicated region
      $region40: #{tpu_custom_call.1} parent=38 // pred_check
        %p232 = pneg %p62
      $region41: #{tpu_custom_call.1} parent=38 // pred_check_branch
        %234 = sbr.rel (%p232) target = $region43
      $region42: #{tpu_custom_call.1} parent=38 // pred_region
        %p235 = scmp.lt.s32.totalorder %s13, 1
        %s236 = scalar_select %p235, %s13, 1
        %s237 = smul.addr %s236, 8
        %s238 = scalar_lea.vmem %s1, %s237
      $region43: #{tpu_custom_call.1} parent=38 // pred_fallthru
        _
    $region39: #{tpu_custom_call.1} parent=5 // pred_fallthru
      _
  $region6: #{tpu_custom_call.1} parent=0 // loop_footer
    %s11 = sadd.s32 1, %s7
  $region7: #{tpu_custom_call.1} parent=0 // loop_footer_branch
    %6 = sbr.rel target = $region3
  $region8: #{tpu_custom_call.1} parent=0 // loop_exit
    _

</llo_original>
